<compile_context>
chip_gen: v5e
topology: v5e:2x2
jax: 0.10.0
libtpu: 0.0.40
codegen_flags: <defaults>
</compile_context>

<pallas_src>
import jax
import jax.numpy as jnp
from jax.experimental import pallas as pl
from jax.experimental.pallas import tpu as pltpu


NEG_SLOPE = 0.01      # PyTorch nn.LeakyReLU default
_NEG_FILL = -1e30     # bias fill for padded logit columns (exp underflows to 0)
_LANE = 128
_SUBLANE = 8


def _round_up(n, m):
    return ((n + m - 1) // m) * m


def _cdiv(a, b):
    return -(-a // b)


def _vmem_capacity_bytes():
    """Per-TensorCore VMEM capacity; conservative fallback is v7x (64 MiB)."""
    try:
        info = pltpu.get_tpu_info()
        cap = getattr(info, "vmem_capacity_bytes", None)
        if cap:
            return int(cap)
    except Exception:
        pass
    return 64 << 20


def _make_quantizer_kernel(n_linear):
    """Kernel body over refs: (x_tile, w0, b0, w1, b1, ..., out_tile)."""

    def kernel(*refs):
        x_ref = refs[0]
        o_ref = refs[-1]
        params = refs[1:-1]  # interleaved (w, b) pairs

        h = x_ref[...]
        for i in range(n_linear):
            w = params[2 * i][...]
            b = params[2 * i + 1][...]          # f32 bias
            # MXU: operands in the weight dtype (bf16 at full rate on v6e/v7x),
            # f32 accumulation.  Elementwise math stays f32 (no bf16 VPU on v5e).
            acc = jnp.dot(h.astype(w.dtype), w, preferred_element_type=jnp.float32)
            acc = acc + b
            if i < n_linear - 1:                # LeakyReLU after hidden Linears
                acc = jnp.maximum(acc, NEG_SLOPE * acc)
            h = acc

        # Numerically stable LogSoftmax over the lane-padded logits.
        # Padded columns carry -1e30 logits -> exp underflows to exactly 0.
        m = jnp.max(h, axis=-1, keepdims=True)
        z = h - m
        lse = jnp.log(jnp.sum(jnp.exp(z), axis=-1, keepdims=True))
        o_ref[...] = (z - lse).astype(o_ref.dtype)

    return kernel


def prepare_params(weights, biases, *, weight_dtype=jnp.bfloat16):
    """Pad/cast parameters once.  Cache the result across forward calls.

    weights[i]: (in_i, out_i); biases[i]: (1, out_i) or (out_i,).
    Only the LAST layer's output dim is padded to 128 lanes; its padded bias
    columns get -1e30 so they vanish from the log-softmax denominator.
    """
    n_linear = len(weights)
    latent_dim = weights[0].shape[0]
    n_clusters = weights[-1].shape[1]
    out_pad = _round_up(n_clusters, _LANE)

    params = []
    for li, (w, b) in enumerate(zip(weights, biases)):
        din, dout = w.shape
        w_dt = w.dtype if weight_dtype is None else weight_dtype
        b_f32 = jnp.asarray(b, jnp.float32).reshape(1, dout)
        if li == n_linear - 1:
            w_p = jnp.zeros((din, out_pad), w_dt).at[:, :dout].set(w.astype(w_dt))
            b_p = jnp.full((1, out_pad), _NEG_FILL, jnp.float32).at[:, :dout].set(b_f32)
        else:
            w_p = w.astype(w_dt)
            b_p = b_f32
        params += [w_p, b_p]

    return {
        "params": tuple(params),
        "n_linear": n_linear,
        "latent_dim": latent_dim,
        "n_clusters": n_clusters,
        "out_pad": out_pad,
    }


def _apply(x, prepared, *, batch_tile=512):
    params = prepared["params"]
    n_linear = prepared["n_linear"]
    latent_dim = prepared["latent_dim"]
    n_clusters = prepared["n_clusters"]
    out_pad = prepared["out_pad"]

    batch, xd = x.shape
    assert xd == latent_dim, "x feature dim must equal latent_dim"
    compute_dtype = x.dtype
    assert compute_dtype in (jnp.dtype(jnp.float32), jnp.dtype(jnp.bfloat16)), (
        "activations must be f32/bf16 (the -1e30 padded-logit fill overflows f16)")

    # ---- batch tiling -------------------------------------------------------
    b8 = _round_up(batch, _SUBLANE)
    tb = _round_up(min(batch_tile, b8), _SUBLANE)
    if b8 >= 2 * _SUBLANE:
        # Guarantee >= 2 grid steps so the "parallel" batch axis can be sharded
        # across both TensorCores on v7x (no-op on v5e/v6e).
        tb = min(tb, _round_up(_cdiv(b8, 2), _SUBLANE))
    b_pad = _round_up(b8, tb)
    nb = b_pad // tb

    # Only pad batch rows if needed (zero rows are exact; they are sliced off).
    x_in = x if b_pad == batch else (
        jnp.zeros((b_pad, latent_dim), compute_dtype).at[:batch].set(x))

    # ---- block specs --------------------------------------------------------
    in_specs = [pl.BlockSpec((tb, latent_dim), lambda i: (i, 0))]
    for p in params:
        # Full-array blocks with a constant index map -> VMEM-resident params.
        in_specs.append(pl.BlockSpec(p.shape, lambda i: (0, 0)))
    out_spec = pl.BlockSpec((tb, out_pad), lambda i: (i, 0))   # lane-dense store
    out_shape = jax.ShapeDtypeStruct((b_pad, out_pad), compute_dtype)

    # ---- cost estimate ------------------------------------------------------
    dims = [latent_dim] + [params[2 * i].shape[1] for i in range(n_linear)]
    flops = 2 * b_pad * sum(dims[i] * dims[i + 1] for i in range(n_linear))
    transcendentals = b_pad * (out_pad + 1)                    # exp per logit + log per row
    itemsize = jnp.dtype(compute_dtype).itemsize
    param_bytes = sum(int(p.size) * p.dtype.itemsize for p in params)
    bytes_accessed = (param_bytes + int(x_in.size) * itemsize
                      + b_pad * out_pad * itemsize)

    # ---- VMEM budget (generation-aware; v7x has 64 MiB/TC) ------------------
    # TODO(synk): switch resident weight/bias blocks to pipeline_mode=pl.Buffered(1)
    # once single-buffered constant blocks are universally supported; until then
    # we budget 2x the param bytes.
    tile_io = 2 * tb * (latent_dim + out_pad) * itemsize       # double-buffered x/out
    interm = 4 * tb * max(dims) * 4                            # f32 intermediates
    needed = 2 * param_bytes + tile_io + interm
    cap = (3 * _vmem_capacity_bytes()) // 4
    vmem_limit = int(min(max(2 * needed, 16 << 20), cap))

    kernel = _make_quantizer_kernel(n_linear)

    out_p = pl.pallas_call(
        kernel,
        out_shape=out_shape,
        grid=(nb,),
        in_specs=in_specs,
        out_specs=out_spec,
        compiler_params=pltpu.CompilerParams(
            dimension_semantics=("parallel",),   # megacore sharding on v7x
            vmem_limit_bytes=vmem_limit),
        cost_estimate=pl.CostEstimate(
            flops=int(flops),
            transcendentals=int(transcendentals),
            bytes_accessed=int(bytes_accessed)),
    )(x_in, *params)

    return out_p[:batch, :n_clusters]


def quantizer_forward(x, weights, biases, *, batch_tile=512,
                      weight_dtype=jnp.bfloat16, prepared=None):
    """x: (B, latent_dim).  weight_dtype=None keeps the original weight dtype.

    For inference loops, call prepare_params(...) once and pass `prepared=`.
    """
    if prepared is None:
        prepared = prepare_params(weights, biases, weight_dtype=weight_dtype)
    return _apply(x, prepared, batch_tile=batch_tile)


def init_params(key, latent_dim, hidden_dims, n_clusters, dtype=jnp.float32):
    """Deterministic PyTorch-like init (uniform +-1/sqrt(fan_in))."""
    dims = [latent_dim] + list(hidden_dims) + [n_clusters]
    weights, biases = [], []
    for i in range(len(dims) - 1):
        key, kw, kb = jax.random.split(key, 3)
        fan_in, fan_out = dims[i], dims[i + 1]
        bound = 1.0 / jnp.sqrt(jnp.float32(fan_in))
        weights.append(
            jax.random.uniform(kw, (fan_in, fan_out), jnp.float32, -bound, bound
                               ).astype(dtype))
        biases.append(
            jax.random.uniform(kb, (1, fan_out), jnp.float32, -bound, bound
                               ).astype(jnp.float32))
    return weights, biases


def quantizer_ref(x, weights, biases):
    """Pure-JAX reference for correctness checking (f32)."""
    h = x.astype(jnp.float32)
    for i, (w, b) in enumerate(zip(weights, biases)):
        h = h @ w.astype(jnp.float32) + b.astype(jnp.float32)
        if i < len(weights) - 1:
            h = jnp.where(h > 0, h, NEG_SLOPE * h)
    return jax.nn.log_softmax(h, axis=-1)


if __name__ == "__main__":
    # Module-consistent shapes: latent_dim=32, hidden_dims=[64, 48], n_clusters=16.
    latent_dim = 32
    hidden_dims = [64, 48]
    n_clusters = 16

    key = jax.random.PRNGKey(0)
    key, kx1, kx2 = jax.random.split(key, 3)
    weights, biases = init_params(key, latent_dim, hidden_dims, n_clusters)

    # (1) Small batch, exact f32 path (weight_dtype=None keeps f32 weights).
    x_small = jax.random.normal(kx1, (8, latent_dim), jnp.float32)
    out_small = jax.block_until_ready(
        quantizer_forward(x_small, weights, biases, weight_dtype=None))
    ref_small = quantizer_ref(x_small, weights, biases)
    assert out_small.shape == (8, n_clusters)
    assert jnp.allclose(out_small, ref_small, atol=1e-5, rtol=1e-5), "f32 small mismatch"

    # (2) Larger batch: exercises >=2 grid steps (v7x megacore) + batch-tail pad.
    batch_big = 600
    x_big = jax.random.normal(kx2, (batch_big, latent_dim), jnp.float32)
    out_big = jax.block_until_ready(
        quantizer_forward(x_big, weights, biases, weight_dtype=None))
    ref_big = quantizer_ref(x_big, weights, biases)
    assert out_big.shape == (batch_big, n_clusters)
    assert jnp.allclose(out_big, ref_big, atol=1e-5, rtol=1e-5), "f32 big mismatch"

    # (3) Default fast path: bf16 weights, params prepared once and reused.
    prepared_bf16 = prepare_params(weights, biases)          # default bf16 weights
    out_bf16 = jax.block_until_ready(
        quantizer_forward(x_big, weights, biases, prepared=prepared_bf16))
    assert out_bf16.shape == (batch_big, n_clusters)
    assert bool(jnp.all(jnp.isfinite(out_bf16.astype(jnp.float32))))
    max_err = float(jnp.max(jnp.abs(out_bf16.astype(jnp.float32) - ref_big)))
    assert max_err < 0.5, f"bf16 path deviates too much from f32 ref: {max_err}"

    print("KERNEL_OK")
</pallas_src>

<mosaic_0001>
module attributes {stable_mosaic.version = 11 : i64} {
  func.func @kernel(%arg0: i32, %arg1: memref<8x32xf32, #tpu.memory_space<vmem>>, %arg2: memref<32x64xf32, #tpu.memory_space<vmem>>, %arg3: memref<1x64xf32, #tpu.memory_space<vmem>>, %arg4: memref<64x48xf32, #tpu.memory_space<vmem>>, %arg5: memref<1x48xf32, #tpu.memory_space<vmem>>, %arg6: memref<48x128xf32, #tpu.memory_space<vmem>>, %arg7: memref<1x128xf32, #tpu.memory_space<vmem>>, %arg8: memref<8x128xf32, #tpu.memory_space<vmem>>) attributes {dimension_semantics = [#tpu.dimension_semantics<parallel>], iteration_bounds = array<i64: 1>, scalar_prefetch = 0 : i64, scratch_operands = 0 : i64, tpu.core_type = #tpu.core_type<tc>, window_params = [{transform_indices = @transform_0, window_bounds = array<i64: 8, 32>}, {pipeline_mode = #tpu.pipeline_mode<synchronous>, transform_indices = @transform_1, window_bounds = array<i64: 32, 64>}, {pipeline_mode = #tpu.pipeline_mode<synchronous>, transform_indices = @transform_2, window_bounds = array<i64: 1, 64>}, {pipeline_mode = #tpu.pipeline_mode<synchronous>, transform_indices = @transform_3, window_bounds = array<i64: 64, 48>}, {pipeline_mode = #tpu.pipeline_mode<synchronous>, transform_indices = @transform_4, window_bounds = array<i64: 1, 48>}, {pipeline_mode = #tpu.pipeline_mode<synchronous>, transform_indices = @transform_5, window_bounds = array<i64: 48, 128>}, {pipeline_mode = #tpu.pipeline_mode<synchronous>, transform_indices = @transform_6, window_bounds = array<i64: 1, 128>}, {transform_indices = @transform_7, window_bounds = array<i64: 8, 128>}]} {
    %c0 = arith.constant 0 : index
    %c0_0 = arith.constant 0 : index
    %0 = vector.load %arg1[%c0, %c0_0] : memref<8x32xf32, #tpu.memory_space<vmem>>, vector<8x32xf32>
    %c0_1 = arith.constant 0 : index
    %c0_2 = arith.constant 0 : index
    %1 = vector.load %arg2[%c0_1, %c0_2] : memref<32x64xf32, #tpu.memory_space<vmem>>, vector<32x64xf32>
    %c0_3 = arith.constant 0 : index
    %c0_4 = arith.constant 0 : index
    %2 = vector.load %arg3[%c0_3, %c0_4] : memref<1x64xf32, #tpu.memory_space<vmem>>, vector<1x64xf32>
    %cst = arith.constant dense<0.000000e+00> : vector<8x64xf32>
    %3 = tpu.matmul %0, %1, %cst {dimension_numbers = #tpu.dot_dimension_numbers<[1], [0], [0], [1], [0, 0, 1, 1], [], []>} : vector<8x32xf32>, vector<32x64xf32>, vector<8x64xf32> -> vector<8x64xf32>
    %4 = vector.broadcast %2 : vector<1x64xf32> to vector<8x64xf32>
    %5 = arith.addf %3, %4 : vector<8x64xf32>
    %cst_5 = arith.constant 0.00999999977 : f32
    %6 = vector.broadcast %cst_5 : f32 to vector<8x64xf32>
    %7 = arith.mulf %6, %5 : vector<8x64xf32>
    %8 = arith.maximumf %5, %7 : vector<8x64xf32>
    %c0_6 = arith.constant 0 : index
    %c0_7 = arith.constant 0 : index
    %9 = vector.load %arg4[%c0_6, %c0_7] : memref<64x48xf32, #tpu.memory_space<vmem>>, vector<64x48xf32>
    %c0_8 = arith.constant 0 : index
    %c0_9 = arith.constant 0 : index
    %10 = vector.load %arg5[%c0_8, %c0_9] : memref<1x48xf32, #tpu.memory_space<vmem>>, vector<1x48xf32>
    %cst_10 = arith.constant dense<0.000000e+00> : vector<8x48xf32>
    %11 = tpu.matmul %8, %9, %cst_10 {dimension_numbers = #tpu.dot_dimension_numbers<[1], [0], [0], [1], [0, 0, 1, 1], [], []>} : vector<8x64xf32>, vector<64x48xf32>, vector<8x48xf32> -> vector<8x48xf32>
    %12 = vector.broadcast %10 : vector<1x48xf32> to vector<8x48xf32>
    %13 = arith.addf %11, %12 : vector<8x48xf32>
    %cst_11 = arith.constant 0.00999999977 : f32
    %14 = vector.broadcast %cst_11 : f32 to vector<8x48xf32>
    %15 = arith.mulf %14, %13 : vector<8x48xf32>
    %16 = arith.maximumf %13, %15 : vector<8x48xf32>
    %c0_12 = arith.constant 0 : index
    %c0_13 = arith.constant 0 : index
    %17 = vector.load %arg6[%c0_12, %c0_13] : memref<48x128xf32, #tpu.memory_space<vmem>>, vector<48x128xf32>
    %c0_14 = arith.constant 0 : index
    %c0_15 = arith.constant 0 : index
    %18 = vector.load %arg7[%c0_14, %c0_15] : memref<1x128xf32, #tpu.memory_space<vmem>>, vector<1x128xf32>
    %cst_16 = arith.constant dense<0.000000e+00> : vector<8x128xf32>
    %19 = tpu.matmul %16, %17, %cst_16 {dimension_numbers = #tpu.dot_dimension_numbers<[1], [0], [0], [1], [0, 0, 1, 1], [], []>} : vector<8x48xf32>, vector<48x128xf32>, vector<8x128xf32> -> vector<8x128xf32>
    %20 = vector.broadcast %18 : vector<1x128xf32> to vector<8x128xf32>
    %21 = arith.addf %19, %20 : vector<8x128xf32>
    %cst_17 = arith.constant dense<0xFF800000> : vector<8xf32>
    %22 = vector.multi_reduction <maximumf>, %21, %cst_17 [1] : vector<8x128xf32> to vector<8xf32>
    %23 = vector.shape_cast %22 : vector<8xf32> to vector<8x1xf32>
    %24 = vector.broadcast %23 : vector<8x1xf32> to vector<8x128xf32>
    %25 = arith.subf %21, %24 : vector<8x128xf32>
    %26 = math.exp %25 : vector<8x128xf32>
    %cst_18 = arith.constant dense<0.000000e+00> : vector<8xf32>
    %27 = vector.multi_reduction <add>, %26, %cst_18 [1] : vector<8x128xf32> to vector<8xf32>
    %28 = vector.shape_cast %27 : vector<8xf32> to vector<8x1xf32>
    %29 = math.log %28 : vector<8x1xf32>
    %30 = vector.broadcast %29 : vector<8x1xf32> to vector<8x128xf32>
    %31 = arith.subf %25, %30 : vector<8x128xf32>
    %c0_19 = arith.constant 0 : index
    %c0_20 = arith.constant 0 : index
    %32 = vector.load %arg8[%c0_19, %c0_20] : memref<8x128xf32, #tpu.memory_space<vmem>>, vector<8x128xf32>
    tpu.vector_store %arg8[%c0_19, %c0_20], %31 {strides = array<i32>} : memref<8x128xf32, #tpu.memory_space<vmem>>, vector<8x128xf32>,
    return
  }
  func.func @transform_0(%arg0: i32) -> (i32, i32) {
    %c0_i32 = arith.constant 0 : i32
    %c0_i32_0 = arith.constant 0 : i32
    return %arg0, %c0_i32 : i32, i32
  }
  func.func @transform_1(%arg0: i32) -> (i32, i32) {
    %c0_i32 = arith.constant 0 : i32
    %c0_i32_0 = arith.constant 0 : i32
    %c0_i32_1 = arith.constant 0 : i32
    return %c0_i32, %c0_i32_0 : i32, i32
  }
  func.func @transform_2(%arg0: i32) -> (i32, i32) {
    %c0_i32 = arith.constant 0 : i32
    %c0_i32_0 = arith.constant 0 : i32
    %c0_i32_1 = arith.constant 0 : i32
    return %c0_i32, %c0_i32_0 : i32, i32
  }
  func.func @transform_3(%arg0: i32) -> (i32, i32) {
    %c0_i32 = arith.constant 0 : i32
    %c0_i32_0 = arith.constant 0 : i32
    %c0_i32_1 = arith.constant 0 : i32
    return %c0_i32, %c0_i32_0 : i32, i32
  }
  func.func @transform_4(%arg0: i32) -> (i32, i32) {
    %c0_i32 = arith.constant 0 : i32
    %c0_i32_0 = arith.constant 0 : i32
    %c0_i32_1 = arith.constant 0 : i32
    return %c0_i32, %c0_i32_0 : i32, i32
  }
  func.func @transform_5(%arg0: i32) -> (i32, i32) {
    %c0_i32 = arith.constant 0 : i32
    %c0_i32_0 = arith.constant 0 : i32
    %c0_i32_1 = arith.constant 0 : i32
    return %c0_i32, %c0_i32_0 : i32, i32
  }
  func.func @transform_6(%arg0: i32) -> (i32, i32) {
    %c0_i32 = arith.constant 0 : i32
    %c0_i32_0 = arith.constant 0 : i32
    %c0_i32_1 = arith.constant 0 : i32
    return %c0_i32, %c0_i32_0 : i32, i32
  }
  func.func @transform_7(%arg0: i32) -> (i32, i32) {
    %c0_i32 = arith.constant 0 : i32
    %c0_i32_0 = arith.constant 0 : i32
    return %arg0, %c0_i32 : i32, i32
  }
}

</mosaic_0001>

<llo_original>
// kernel: tpu_custom_call.1
$region0: #{tpu_custom_call.1}
  #allocation0 [shape = 'u32[]', space=smem, size = 0x4, offset = 0x4, fixed_abs, tag = 'smem constant byte address 0x4 - core index']
  #allocation1 [shape = 'u32[72,128]{1,0:T(1,128)}', space=vmem, size = 0x9000, scoped, tag = 'internal scratch']
  %s0 = inlined_call_operand.vmem [shape: f32[8,32], index: 0, kind: input, shape index: {}]
  %s1 = inlined_call_operand.vmem [shape: f32[32,64], index: 1, kind: input, shape index: {}]
  %s2 = inlined_call_operand.vmem [shape: f32[1,64], index: 2, kind: input, shape index: {}]
  %s3 = inlined_call_operand.vmem [shape: f32[64,48], index: 3, kind: input, shape index: {}]
  %s4 = inlined_call_operand.vmem [shape: f32[1,48], index: 4, kind: input, shape index: {}]
  %s5 = inlined_call_operand.vmem [shape: f32[48,128], index: 5, kind: input, shape index: {}]
  %s6 = inlined_call_operand.vmem [shape: f32[1,128], index: 6, kind: input, shape index: {}]
  %s7 = inlined_call_operand.hbm [shape: f32[8,128], index: 7, kind: output, shape index: {}]
  %s8 = sld [smem:[#allocation0]]
  $region38: #{tpu_custom_call.1} parent=0
    _
  %s10 = ssub.s32 1, %s8
  %s11 = scalar_select 0, %s10, %s8
  $region1: #{tpu_custom_call.1} parent=0
    #allocation2 [shape = 'u8[4096]{0}', space=vmem, size = 0x1000, scoped, tag = 'output window, operand 0, single buffered']
    #allocation3 [shape = 's32[1]{0}', space=sflag, size = 0x4, scoped, tag = 'scoped memory for tpu_custom_call.1']
    %12 = vsyncpa [#allocation3], 0
    // Predicated region
    $region2: #{tpu_custom_call.1} parent=1 // pred_check
      _
    $region3: #{tpu_custom_call.1} parent=1 // pred_check_branch
      %14 = sbr.rel (0) target = $region5
    $region4: #{tpu_custom_call.1} parent=1 // pred_region
      _
    $region5: #{tpu_custom_call.1} parent=1 // pred_fallthru
      _
    // Predicated region
    $region6: #{tpu_custom_call.1} parent=1 // pred_check
      _
    $region7: #{tpu_custom_call.1} parent=1 // pred_check_branch
      %16 = sbr.rel (0) target = $region9
    $region8: #{tpu_custom_call.1} parent=1 // pred_region
      _
    $region9: #{tpu_custom_call.1} parent=1 // pred_fallthru
      _
    // Predicated region
    $region10: #{tpu_custom_call.1} parent=1 // pred_check
      _
    $region11: #{tpu_custom_call.1} parent=1 // pred_check_branch
      %18 = sbr.rel (0) target = $region13
    $region12: #{tpu_custom_call.1} parent=1 // pred_region
      _
    $region13: #{tpu_custom_call.1} parent=1 // pred_fallthru
      _
    // Predicated region
    $region14: #{tpu_custom_call.1} parent=1 // pred_check
      _
    $region15: #{tpu_custom_call.1} parent=1 // pred_check_branch
      %20 = sbr.rel (0) target = $region17
    $region16: #{tpu_custom_call.1} parent=1 // pred_region
      _
    $region17: #{tpu_custom_call.1} parent=1 // pred_fallthru
      _
    // Predicated region
    $region18: #{tpu_custom_call.1} parent=1 // pred_check
      _
    $region19: #{tpu_custom_call.1} parent=1 // pred_check_branch
      %22 = sbr.rel (0) target = $region21
    $region20: #{tpu_custom_call.1} parent=1 // pred_region
      _
    $region21: #{tpu_custom_call.1} parent=1 // pred_fallthru
      _
    // Predicated region
    $region22: #{tpu_custom_call.1} parent=1 // pred_check
      _
    $region23: #{tpu_custom_call.1} parent=1 // pred_check_branch
      %24 = sbr.rel (0) target = $region25
    $region24: #{tpu_custom_call.1} parent=1 // pred_region
      _
    $region25: #{tpu_custom_call.1} parent=1 // pred_fallthru
      _
    // Predicated region
    $region26: #{tpu_custom_call.1} parent=1 // pred_check
      _
    $region27: #{tpu_custom_call.1} parent=1 // pred_check_branch
      %26 = sbr.rel (0) target = $region29
    $region28: #{tpu_custom_call.1} parent=1 // pred_region
      _
    $region29: #{tpu_custom_call.1} parent=1 // pred_fallthru
      _
    %v27 = vld [vmem:[%s0] sm:$0xff]
    %v28 = vld [vmem:[%s1] sm:$0xff]
    %v29 = vld [vmem:[%s1 + $0x8] sm:$0xff]
    %v30 = vld [vmem:[%s1 + $0x10] sm:$0xff]
    %v31 = vld [vmem:[%s1 + $0x18] sm:$0xff]
    %v32 = vld [vmem:[%s2] sm:$0x1]
    %v34 = vperm.slane %v32, 0
    %vm36 = vcmask 261120
    %v38 = vsel %vm36, %v27, 0
    %40 = vmatpush.msra.mxu0 0.0
    %41 = vmatpush.msra.mxu0 0.0
    %42 = vmatpush.msra.mxu0 0.0
    %43 = vmatpush.msra.mxu0 0.0
    %44 = vmatpush.msra.mxu0 0.0
    %45 = vmatpush.msra.mxu0 0.0
    %46 = vmatpush.msra.mxu0 0.0
    %47 = vmatpush.msra.mxu0 0.0
    %48 = vmatpush.msra.mxu0 0.0
    %49 = vmatpush.msra.mxu0 0.0
    %50 = vmatpush.msra.mxu0 0.0
    %51 = vmatpush.msra.mxu0 0.0
    %52 = vmatpush.msra.mxu0 %v31
    %53 = vmatpush.msra.mxu0 %v30
    %54 = vmatpush.msra.mxu0 %v29
    %55 = vmatpush.msra.mxu0 %v28
    %56 = vmatmul.f32.gmra.mxu0 %v38
    %v57 = vpop.f32.mrf.mxu0
    %v58 = vadd.f32 %v34, %v57
    %59 = vdwg.mxu0
    %v60 = vmul.f32 %v58, 0.01
    %v61 = vmax.f32 %v58, %v60
    %v62 = vld [vmem:[%s3] sm:$0xff]
    %v63 = vld [vmem:[%s3 + $0x8] sm:$0xff]
    %v64 = vld [vmem:[%s3 + $0x10] sm:$0xff]
    %v65 = vld [vmem:[%s3 + $0x18] sm:$0xff]
    %v66 = vld [vmem:[%s3 + $0x20] sm:$0xff]
    %v67 = vld [vmem:[%s3 + $0x28] sm:$0xff]
    %v68 = vld [vmem:[%s3 + $0x30] sm:$0xff]
    %v69 = vld [vmem:[%s3 + $0x38] sm:$0xff]
    %v70 = vld [vmem:[%s4] sm:$0x1]
    %v72 = vperm.slane %v70, 0
    %vm74 = vcmask 523264
    %v76 = vsel %vm74, %v61, 0
    %78 = vmatpush.msra.mxu0 0.0
    %79 = vmatpush.msra.mxu0 0.0
    %80 = vmatpush.msra.mxu0 0.0
    %81 = vmatpush.msra.mxu0 0.0
    %82 = vmatpush.msra.mxu0 0.0
    %83 = vmatpush.msra.mxu0 0.0
    %84 = vmatpush.msra.mxu0 0.0
    %85 = vmatpush.msra.mxu0 0.0
    %86 = vmatpush.msra.mxu0 %v69
    %87 = vmatpush.msra.mxu0 %v68
    %88 = vmatpush.msra.mxu0 %v67
    %89 = vmatpush.msra.mxu0 %v66
    %90 = vmatpush.msra.mxu0 %v65
    %91 = vmatpush.msra.mxu0 %v64
    %92 = vmatpush.msra.mxu0 %v63
    %93 = vmatpush.msra.mxu0 %v62
    %94 = vmatmul.f32.gmra.mxu0 %v76
    %v95 = vpop.f32.mrf.mxu0
    %v96 = vadd.f32 %v72, %v95
    %97 = vdwg.mxu0
    %v98 = vmul.f32 %v96, 0.01
    %v99 = vmax.f32 %v96, %v98
    %v100 = vld [vmem:[%s5] sm:$0xff]
    %v101 = vld [vmem:[%s5 + $0x8] sm:$0xff]
    %v102 = vld [vmem:[%s5 + $0x10] sm:$0xff]
    %v103 = vld [vmem:[%s5 + $0x18] sm:$0xff]
    %v104 = vld [vmem:[%s5 + $0x20] sm:$0xff]
    %v105 = vld [vmem:[%s5 + $0x28] sm:$0xff]
    %v106 = vld [vmem:[%s6] sm:$0x1]
    %v108 = vperm.slane %v106, 0
    %vm110 = vcmask 392192
    %v112 = vsel %vm110, %v99, 0
    %114 = vmatpush.msra.mxu0 0.0
    %115 = vmatpush.msra.mxu0 0.0
    %116 = vmatpush.msra.mxu0 0.0
    %117 = vmatpush.msra.mxu0 0.0
    %118 = vmatpush.msra.mxu0 0.0
    %119 = vmatpush.msra.mxu0 0.0
    %120 = vmatpush.msra.mxu0 0.0
    %121 = vmatpush.msra.mxu0 0.0
    %122 = vmatpush.msra.mxu0 0.0
    %123 = vmatpush.msra.mxu0 0.0
    %124 = vmatpush.msra.mxu0 %v105
    %125 = vmatpush.msra.mxu0 %v104
    %126 = vmatpush.msra.mxu0 %v103
    %127 = vmatpush.msra.mxu0 %v102
    %128 = vmatpush.msra.mxu0 %v101
    %129 = vmatpush.msra.mxu0 %v100
    %130 = vmatmul.f32.gmra.mxu0 %v112
    %v131 = vpop.f32.mrf.mxu0
    %v132 = vadd.f32 %v108, %v131
    %133 = vdwg.mxu0
    %134 = vmax.xlane.f32.xlu0 %v132
    %v135 = vpop.xlane.xlu0 %134
    %v136 = vsub.f32 %v132, %v135
    %v137 = vmul.f32 %v136, 1.442695
    %v138 = vpow.pop %v137
    %139 = vadd.xlane.f32.xlu0 %v138
    %v140 = vpop.xlane.xlu0 %139
    %v141 = vlog2.pop %v140
    %v142 = vmul.f32 %v141, 0.6931472
    %v143 = vsub.f32 %v136, %v142
    %144 = vst [vmem:[#allocation2] sm:$0xff] %v143
    // Predicated region
    $region30: #{tpu_custom_call.1} parent=1 // pred_check
      _
    $region31: #{tpu_custom_call.1} parent=1 // pred_check_branch
      %146 = sbr.rel (0) target = $region33
    $region32: #{tpu_custom_call.1} parent=1 // pred_region
      %148 = vsyncadd [#allocation3], 0
      %s150 = sshll.u32 [#allocation2], 4
      %s151 = int_to_ptr.vmem [resolvable:$true] %s150
      %s152 = sshll.u32 %s7, 4
      %s153 = int_to_ptr.hbm [resolvable:$true] %s152
      %155 = dma.vmem_to_hbm [thread:$0]  %s151, 128, %s153, [#allocation3]
    $region33: #{tpu_custom_call.1} parent=1 // pred_fallthru
      _
    // Predicated region
    $region34: #{tpu_custom_call.1} parent=1 // pred_check
      _
    $region35: #{tpu_custom_call.1} parent=1 // pred_check_branch
      %157 = sbr.rel (0) target = $region37
    $region36: #{tpu_custom_call.1} parent=1 // pred_region
      %159 = dma.done [#allocation3], 128
    $region37: #{tpu_custom_call.1} parent=1 // pred_fallthru
      _
    %160 = vsyncpa [#allocation3], 1

</llo_original>
